<compile_context>
chip_gen: v7x
topology: tpu7x:2x2x1
jax: 0.10.0
libtpu: 0.0.40
codegen_flags: <defaults>
</compile_context>

<pallas_src>
import functools

import jax
import jax.numpy as jnp
from jax import lax
from jax.experimental import pallas as pl
from jax.experimental.pallas import tpu as pltpu

NUM_CLASSES = 4          # num object categories (no-object class appended)
C1 = NUM_CLASSES + 1
EOS_COEF = 0.1           # weight of the no-object class in the CE loss
_EPS = 1e-9


def _round_up(x, m):
    return (x + m - 1) // m * m


# ---------------- Fused Pallas kernel ----------------

def _criterion_kernel(logits_ref, tgt_ref, boxes_ref, out_ref, *,
                      batch, tgt_per_image, num_matched, num_boxes):
    """Emits [loss_ce, class_error, cardinality_error, loss_bbox, loss_giou]
    into a packed (1, 5) SMEM output.

    logits_ref: (C1, B_pad, Q_pad) f32, class-major, zero-padded planes.
    tgt_ref:    (B_pad, Q_pad) int32 code:
                  label in [0, C-1]  -> matched query (identity matcher),
                  NUM_CLASSES        -> real but unmatched query (no-object),
                  -1                 -> padding.
    boxes_ref:  (8, N_pad) f32: src cxcywh on sublanes 0-3, tgt on 4-7;
                padded columns hold identical valid boxes (zero contribution).
    """
    logits = logits_ref[...]                       # (C1, B_pad, Q_pad)
    tgt = tgt_ref[...]                             # (B_pad, Q_pad)
    num_cls = logits.shape[0]
    no_obj = num_cls - 1

    valid = tgt >= 0                               # real (non-padding) queries
    matched = valid & (tgt < no_obj)               # matched queries (labels < no-object)

    # -- single unrolled pass over the small class-major axis --
    m_first = logits[0]                            # max over real classes 0..C-2
    for c in range(1, no_obj):
        m_first = jnp.maximum(m_first, logits[c])
    m = jnp.maximum(m_first, logits[no_obj])       # global max (reused, not recomputed)

    se = jnp.zeros_like(m)                         # sum exp(x - m)
    x_t = jnp.zeros_like(m)                        # logit at target class
    for c in range(num_cls):
        lc = logits[c]
        se = se + jnp.exp(lc - m)
        x_t = jnp.where(tgt == c, lc, x_t)
    lse = jnp.log(se) + m                          # logsumexp over classes

    # -- loss_ce: class-weighted cross-entropy (padding weight 0, no one-hot) --
    w_t = jnp.where(valid,
                    jnp.where(tgt == no_obj, jnp.float32(EOS_COEF), jnp.float32(1.0)),
                    jnp.float32(0.0))
    out_ref[0, 0] = jnp.sum(w_t * (lse - x_t)) / jnp.sum(w_t)

    # -- class_error: 100 - top1 accuracy on matched predictions --
    # correctness as (target logit == max logit); no int32 pred array.
    correct = jnp.where(matched & (x_t == m), 1.0, 0.0)
    out_ref[0, 1] = 100.0 - 100.0 * jnp.sum(correct) / num_matched

    # -- cardinality_error: |#(argmax != no-object) - #targets| averaged over B --
    non_empty = jnp.where(valid,
                          (m_first >= logits[no_obj]).astype(jnp.float32), 0.0)
    card_pred = jnp.sum(non_empty, axis=1, keepdims=True)           # (B_pad, 1)
    b_iota = lax.broadcasted_iota(jnp.int32, card_pred.shape, 0)
    card_err = jnp.where(b_iota < batch,
                         jnp.abs(card_pred - jnp.float32(tgt_per_image)), 0.0)
    out_ref[0, 2] = jnp.sum(card_err) / batch

    # -- loss_bbox (L1) + loss_giou on matched pairs (coords on sublanes) --
    boxes = boxes_ref[...]                         # (8, N_pad)
    s = boxes[0:4]                                 # (4, N_pad) src cxcywh
    t = boxes[4:8]                                 # (4, N_pad) tgt cxcywh
    out_ref[0, 3] = jnp.sum(jnp.abs(s - t)) / num_boxes

    def to_xyxy(box):
        cx, cy, w, h = box[0:1], box[1:2], box[2:3], box[3:4]        # (1, N_pad)
        return cx - 0.5 * w, cy - 0.5 * h, cx + 0.5 * w, cy + 0.5 * h

    sx0, sy0, sx1, sy1 = to_xyxy(s)
    tx0, ty0, tx1, ty1 = to_xyxy(t)
    area_s = (sx1 - sx0) * (sy1 - sy0)
    area_t = (tx1 - tx0) * (ty1 - ty0)
    inter = (jnp.maximum(jnp.minimum(sx1, tx1) - jnp.maximum(sx0, tx0), 0.0) *
             jnp.maximum(jnp.minimum(sy1, ty1) - jnp.maximum(sy0, ty0), 0.0))
    union = area_s + area_t - inter
    iou = inter / jnp.maximum(union, _EPS)
    earea = (jnp.maximum(jnp.maximum(sx1, tx1) - jnp.minimum(sx0, tx0), 0.0) *
             jnp.maximum(jnp.maximum(sy1, ty1) - jnp.minimum(sy0, ty0), 0.0))
    giou = iou - (earea - union) / jnp.maximum(earea, _EPS)
    out_ref[0, 4] = jnp.sum(1.0 - giou) / num_boxes


# ---------------- Wrapper (pure layout plumbing in plain JAX) ----------------

def set_criterion_forward(pred_logits, pred_boxes, tgt_labels, tgt_boxes):
    B, Q, C = pred_logits.shape
    _, T = tgt_labels.shape

    B_pad = _round_up(max(B, 1), 8)                # sublane-dense
    Q_pad = _round_up(max(Q, 1), 128)              # lane-dense

    # class-major logits, zero-padded to dense (8k, 128m) planes
    logits_cm = jnp.transpose(pred_logits, (2, 0, 1))                 # (C1, B, Q)
    logits_cm = jnp.pad(logits_cm, ((0, 0), (0, B_pad - B), (0, Q_pad - Q)))

    # identity matcher: prediction j <-> target j. target code built by concat
    # (no scatter): label for matched, no-object for unmatched, -1 for padding.
    target_code = jnp.concatenate(
        [tgt_labels.astype(jnp.int32),
         jnp.full((B, Q - T), NUM_CLASSES, jnp.int32)], axis=1)       # (B, Q)
    target_code = jnp.pad(target_code, ((0, B_pad - B), (0, Q_pad - Q)),
                          constant_values=-1)                         # (B_pad, Q_pad)

    # matched boxes via static slice (no gather); src+tgt packed into one
    # (8, N_pad) array, coords on sublanes, pairs on lanes.  Padded columns get
    # the same valid box (cx=cy=w=h=0.25) for src and tgt => L1 = 0, 1-GIoU = 0.
    N = B * T
    N_pad = _round_up(max(N, 1), 128)
    src_t = jnp.transpose(pred_boxes[:, :T].reshape(N, 4))            # (4, N)
    tgt_t = jnp.transpose(tgt_boxes.reshape(N, 4))                    # (4, N)
    boxes = jnp.concatenate([src_t, tgt_t], axis=0)                   # (8, N)
    boxes = jnp.pad(boxes, ((0, 0), (0, N_pad - N)), constant_values=0.25)

    num_boxes = float(max(B * T, 1))
    num_matched = float(max(B * T, 1))             # clamped: T=0 safe

    vmem = pl.BlockSpec(memory_space=pltpu.MemorySpace.VMEM)
    out = pl.pallas_call(
        functools.partial(_criterion_kernel,
                          batch=B,
                          tgt_per_image=float(T),
                          num_matched=num_matched,
                          num_boxes=num_boxes),
        out_shape=jax.ShapeDtypeStruct((1, 5), jnp.float32),
        in_specs=[vmem, vmem, vmem],
        out_specs=pl.BlockSpec(memory_space=pltpu.MemorySpace.SMEM),
    )(logits_cm, target_code, boxes)

    return {
        "loss_ce": out[0, 0],
        "class_error": out[0, 1],
        "cardinality_error": out[0, 2],
        "loss_bbox": out[0, 3],
        "loss_giou": out[0, 4],
    }


if __name__ == "__main__":
    key = jax.random.PRNGKey(0)
    B, Q, T = 2, 8, 3
    k1, k2, k3, k4, k5 = jax.random.split(key, 5)

    pred_logits = jax.random.normal(k1, (B, Q, C1), jnp.float32)
    pred_boxes = jax.nn.sigmoid(jax.random.normal(k2, (B, Q, 4), jnp.float32))
    tgt_labels = jax.random.randint(k3, (B, T), 0, NUM_CLASSES).astype(jnp.int32)
    cxcy = 0.25 + 0.5 * jax.random.uniform(k4, (B, T, 2), jnp.float32)
    wh = 0.05 + 0.3 * jax.random.uniform(k5, (B, T, 2), jnp.float32)
    tgt_boxes = jnp.concatenate([cxcy, wh], axis=-1)

    losses = set_criterion_forward(pred_logits, pred_boxes, tgt_labels, tgt_boxes)
    jax.block_until_ready(losses)
    print("KERNEL_OK")
</pallas_src>

<mosaic_0001>
module attributes {stable_mosaic.version = 11 : i64} {
  func.func @_criterion_kernel(%arg0: memref<5x8x128xf32, #tpu.memory_space<vmem>>, %arg1: memref<8x128xi32, #tpu.memory_space<vmem>>, %arg2: memref<8x128xf32, #tpu.memory_space<vmem>>, %arg3: memref<1x5xf32, #tpu.memory_space<smem>>) attributes {dimension_semantics = [], scalar_prefetch = 0 : i64, scratch_operands = 0 : i64, tpu.core_type = #tpu.core_type<tc>} {
    %c0 = arith.constant 0 : index
    %c0_0 = arith.constant 0 : index
    %c0_1 = arith.constant 0 : index
    %0 = vector.load %arg0[%c0, %c0_0, %c0_1] : memref<5x8x128xf32, #tpu.memory_space<vmem>>, vector<5x8x128xf32>
    %c0_2 = arith.constant 0 : index
    %c0_3 = arith.constant 0 : index
    %1 = vector.load %arg1[%c0_2, %c0_3] : memref<8x128xi32, #tpu.memory_space<vmem>>, vector<8x128xi32>
    %c0_i32 = arith.constant 0 : i32
    %2 = vector.broadcast %c0_i32 : i32 to vector<8x128xi32>
    %3 = arith.cmpi sge, %1, %2 : vector<8x128xi32>
    %c4_i32 = arith.constant 4 : i32
    %4 = vector.broadcast %c4_i32 : i32 to vector<8x128xi32>
    %5 = arith.cmpi slt, %1, %4 : vector<8x128xi32>
    %6 = arith.andi %3, %5 : vector<8x128xi1>
    %7 = vector.extract_strided_slice %0 {offsets = [0, 0, 0], sizes = [1, 8, 128], strides = [1, 1, 1]} : vector<5x8x128xf32> to vector<1x8x128xf32>
    %8 = vector.shape_cast %7 : vector<1x8x128xf32> to vector<8x128xf32>
    %9 = vector.extract_strided_slice %0 {offsets = [1, 0, 0], sizes = [1, 8, 128], strides = [1, 1, 1]} : vector<5x8x128xf32> to vector<1x8x128xf32>
    %10 = vector.shape_cast %9 : vector<1x8x128xf32> to vector<8x128xf32>
    %11 = arith.maximumf %8, %10 : vector<8x128xf32>
    %12 = vector.extract_strided_slice %0 {offsets = [2, 0, 0], sizes = [1, 8, 128], strides = [1, 1, 1]} : vector<5x8x128xf32> to vector<1x8x128xf32>
    %13 = vector.shape_cast %12 : vector<1x8x128xf32> to vector<8x128xf32>
    %14 = arith.maximumf %11, %13 : vector<8x128xf32>
    %15 = vector.extract_strided_slice %0 {offsets = [3, 0, 0], sizes = [1, 8, 128], strides = [1, 1, 1]} : vector<5x8x128xf32> to vector<1x8x128xf32>
    %16 = vector.shape_cast %15 : vector<1x8x128xf32> to vector<8x128xf32>
    %17 = arith.maximumf %14, %16 : vector<8x128xf32>
    %18 = vector.extract_strided_slice %0 {offsets = [4, 0, 0], sizes = [1, 8, 128], strides = [1, 1, 1]} : vector<5x8x128xf32> to vector<1x8x128xf32>
    %19 = vector.shape_cast %18 : vector<1x8x128xf32> to vector<8x128xf32>
    %20 = arith.maximumf %17, %19 : vector<8x128xf32>
    %cst = arith.constant 0.000000e+00 : f32
    %21 = vector.broadcast %cst : f32 to vector<8x128xf32>
    %cst_4 = arith.constant 0.000000e+00 : f32
    %22 = vector.broadcast %cst_4 : f32 to vector<8x128xf32>
    %23 = vector.extract_strided_slice %0 {offsets = [0, 0, 0], sizes = [1, 8, 128], strides = [1, 1, 1]} : vector<5x8x128xf32> to vector<1x8x128xf32>
    %24 = vector.shape_cast %23 : vector<1x8x128xf32> to vector<8x128xf32>
    %25 = arith.subf %24, %20 : vector<8x128xf32>
    %26 = math.exp %25 : vector<8x128xf32>
    %27 = arith.addf %21, %26 : vector<8x128xf32>
    %c0_i32_5 = arith.constant 0 : i32
    %28 = vector.broadcast %c0_i32_5 : i32 to vector<8x128xi32>
    %29 = arith.cmpi eq, %1, %28 : vector<8x128xi32>
    %30 = arith.select %29, %24, %22 : vector<8x128xi1>, vector<8x128xf32>
    %31 = vector.extract_strided_slice %0 {offsets = [1, 0, 0], sizes = [1, 8, 128], strides = [1, 1, 1]} : vector<5x8x128xf32> to vector<1x8x128xf32>
    %32 = vector.shape_cast %31 : vector<1x8x128xf32> to vector<8x128xf32>
    %33 = arith.subf %32, %20 : vector<8x128xf32>
    %34 = math.exp %33 : vector<8x128xf32>
    %35 = arith.addf %27, %34 : vector<8x128xf32>
    %c1_i32 = arith.constant 1 : i32
    %36 = vector.broadcast %c1_i32 : i32 to vector<8x128xi32>
    %37 = arith.cmpi eq, %1, %36 : vector<8x128xi32>
    %38 = arith.select %37, %32, %30 : vector<8x128xi1>, vector<8x128xf32>
    %39 = vector.extract_strided_slice %0 {offsets = [2, 0, 0], sizes = [1, 8, 128], strides = [1, 1, 1]} : vector<5x8x128xf32> to vector<1x8x128xf32>
    %40 = vector.shape_cast %39 : vector<1x8x128xf32> to vector<8x128xf32>
    %41 = arith.subf %40, %20 : vector<8x128xf32>
    %42 = math.exp %41 : vector<8x128xf32>
    %43 = arith.addf %35, %42 : vector<8x128xf32>
    %c2_i32 = arith.constant 2 : i32
    %44 = vector.broadcast %c2_i32 : i32 to vector<8x128xi32>
    %45 = arith.cmpi eq, %1, %44 : vector<8x128xi32>
    %46 = arith.select %45, %40, %38 : vector<8x128xi1>, vector<8x128xf32>
    %47 = vector.extract_strided_slice %0 {offsets = [3, 0, 0], sizes = [1, 8, 128], strides = [1, 1, 1]} : vector<5x8x128xf32> to vector<1x8x128xf32>
    %48 = vector.shape_cast %47 : vector<1x8x128xf32> to vector<8x128xf32>
    %49 = arith.subf %48, %20 : vector<8x128xf32>
    %50 = math.exp %49 : vector<8x128xf32>
    %51 = arith.addf %43, %50 : vector<8x128xf32>
    %c3_i32 = arith.constant 3 : i32
    %52 = vector.broadcast %c3_i32 : i32 to vector<8x128xi32>
    %53 = arith.cmpi eq, %1, %52 : vector<8x128xi32>
    %54 = arith.select %53, %48, %46 : vector<8x128xi1>, vector<8x128xf32>
    %55 = vector.extract_strided_slice %0 {offsets = [4, 0, 0], sizes = [1, 8, 128], strides = [1, 1, 1]} : vector<5x8x128xf32> to vector<1x8x128xf32>
    %56 = vector.shape_cast %55 : vector<1x8x128xf32> to vector<8x128xf32>
    %57 = arith.subf %56, %20 : vector<8x128xf32>
    %58 = math.exp %57 : vector<8x128xf32>
    %59 = arith.addf %51, %58 : vector<8x128xf32>
    %c4_i32_6 = arith.constant 4 : i32
    %60 = vector.broadcast %c4_i32_6 : i32 to vector<8x128xi32>
    %61 = arith.cmpi eq, %1, %60 : vector<8x128xi32>
    %62 = arith.select %61, %56, %54 : vector<8x128xi1>, vector<8x128xf32>
    %63 = math.log %59 : vector<8x128xf32>
    %64 = arith.addf %63, %20 : vector<8x128xf32>
    %c4_i32_7 = arith.constant 4 : i32
    %65 = vector.broadcast %c4_i32_7 : i32 to vector<8x128xi32>
    %66 = arith.cmpi eq, %1, %65 : vector<8x128xi32>
    %cst_8 = arith.constant 1.000000e-01 : f32
    %cst_9 = arith.constant 1.000000e+00 : f32
    %67 = vector.broadcast %cst_8 : f32 to vector<8x128xf32>
    %68 = vector.broadcast %cst_9 : f32 to vector<8x128xf32>
    %69 = arith.select %66, %67, %68 : vector<8x128xi1>, vector<8x128xf32>
    %cst_10 = arith.constant 0.000000e+00 : f32
    %70 = vector.broadcast %cst_10 : f32 to vector<8x128xf32>
    %71 = arith.select %3, %69, %70 : vector<8x128xi1>, vector<8x128xf32>
    %72 = arith.subf %64, %62 : vector<8x128xf32>
    %73 = arith.mulf %71, %72 : vector<8x128xf32>
    %74 = vector.shape_cast %73 : vector<8x128xf32> to vector<1x8x128xf32>
    %cst_11 = arith.constant dense<0.000000e+00> : vector<1xf32>
    %75 = vector.multi_reduction <add>, %74, %cst_11 [1, 2] : vector<1x8x128xf32> to vector<1xf32>
    %76 = vector.shape_cast %75 : vector<1xf32> to vector<1x1x1xf32>
    %77 = vector.extract %76[0, 0, 0] : f32 from vector<1x1x1xf32>
    %78 = vector.shape_cast %71 : vector<8x128xf32> to vector<1x8x128xf32>
    %cst_12 = arith.constant dense<0.000000e+00> : vector<1xf32>
    %79 = vector.multi_reduction <add>, %78, %cst_12 [1, 2] : vector<1x8x128xf32> to vector<1xf32>
    %80 = vector.shape_cast %79 : vector<1xf32> to vector<1x1x1xf32>
    %81 = vector.extract %80[0, 0, 0] : f32 from vector<1x1x1xf32>
    %82 = arith.divf %77, %81 : f32
    %c0_13 = arith.constant 0 : index
    %c0_14 = arith.constant 0 : index
    %83 = memref.load %arg3[%c0_13, %c0_14] : memref<1x5xf32, #tpu.memory_space<smem>>
    memref.store %82, %arg3[%c0_13, %c0_14] : memref<1x5xf32, #tpu.memory_space<smem>>
    %84 = arith.cmpf oeq, %62, %20 : vector<8x128xf32>
    %85 = arith.andi %6, %84 : vector<8x128xi1>
    %cst_15 = arith.constant 1.000000e+00 : f32
    %cst_16 = arith.constant 0.000000e+00 : f32
    %86 = vector.broadcast %cst_15 : f32 to vector<8x128xf32>
    %87 = vector.broadcast %cst_16 : f32 to vector<8x128xf32>
    %88 = arith.select %85, %86, %87 : vector<8x128xi1>, vector<8x128xf32>
    %89 = vector.shape_cast %88 : vector<8x128xf32> to vector<1x8x128xf32>
    %cst_17 = arith.constant dense<0.000000e+00> : vector<1xf32>
    %90 = vector.multi_reduction <add>, %89, %cst_17 [1, 2] : vector<1x8x128xf32> to vector<1xf32>
    %91 = vector.shape_cast %90 : vector<1xf32> to vector<1x1x1xf32>
    %92 = vector.extract %91[0, 0, 0] : f32 from vector<1x1x1xf32>
    %cst_18 = arith.constant 1.000000e+02 : f32
    %93 = arith.mulf %cst_18, %92 : f32
    %cst_19 = arith.constant 6.000000e+00 : f32
    %94 = arith.divf %93, %cst_19 : f32
    %cst_20 = arith.constant 1.000000e+02 : f32
    %95 = arith.subf %cst_20, %94 : f32
    %c0_21 = arith.constant 0 : index
    %c1 = arith.constant 1 : index
    %96 = memref.load %arg3[%c0_21, %c1] : memref<1x5xf32, #tpu.memory_space<smem>>
    memref.store %95, %arg3[%c0_21, %c1] : memref<1x5xf32, #tpu.memory_space<smem>>
    %97 = vector.extract_strided_slice %0 {offsets = [4, 0, 0], sizes = [1, 8, 128], strides = [1, 1, 1]} : vector<5x8x128xf32> to vector<1x8x128xf32>
    %98 = vector.shape_cast %97 : vector<1x8x128xf32> to vector<8x128xf32>
    %99 = arith.cmpf oge, %17, %98 : vector<8x128xf32>
    %100 = arith.extui %99 : vector<8x128xi1> to vector<8x128xi32>
    %101 = arith.sitofp %100 : vector<8x128xi32> to vector<8x128xf32>
    %cst_22 = arith.constant 0.000000e+00 : f32
    %102 = vector.broadcast %cst_22 : f32 to vector<8x128xf32>
    %103 = arith.select %3, %101, %102 : vector<8x128xi1>, vector<8x128xf32>
    %cst_23 = arith.constant dense<0.000000e+00> : vector<8xf32>
    %104 = vector.multi_reduction <add>, %103, %cst_23 [1] : vector<8x128xf32> to vector<8xf32>
    %105 = vector.shape_cast %104 : vector<8xf32> to vector<8x1xf32>
    %106 = tpu.iota {dimensions = array<i32: 0>} : vector<8x1xi32>
    %c2_i32_24 = arith.constant 2 : i32
    %107 = vector.broadcast %c2_i32_24 : i32 to vector<8x1xi32>
    %108 = arith.cmpi slt, %106, %107 : vector<8x1xi32>
    %cst_25 = arith.constant 3.000000e+00 : f32
    %109 = vector.broadcast %cst_25 : f32 to vector<8x1xf32>
    %110 = arith.subf %105, %109 : vector<8x1xf32>
    %111 = math.absf %110 : vector<8x1xf32>
    %cst_26 = arith.constant 0.000000e+00 : f32
    %112 = vector.broadcast %cst_26 : f32 to vector<8x1xf32>
    %113 = arith.select %108, %111, %112 : vector<8x1xi1>, vector<8x1xf32>
    %114 = vector.shape_cast %113 : vector<8x1xf32> to vector<1x8x1xf32>
    %cst_27 = arith.constant dense<0.000000e+00> : vector<1xf32>
    %115 = vector.multi_reduction <add>, %114, %cst_27 [1, 2] : vector<1x8x1xf32> to vector<1xf32>
    %116 = vector.shape_cast %115 : vector<1xf32> to vector<1x1x1xf32>
    %117 = vector.extract %116[0, 0, 0] : f32 from vector<1x1x1xf32>
    %cst_28 = arith.constant 2.000000e+00 : f32
    %118 = arith.divf %117, %cst_28 : f32
    %c0_29 = arith.constant 0 : index
    %c2 = arith.constant 2 : index
    %119 = memref.load %arg3[%c0_29, %c2] : memref<1x5xf32, #tpu.memory_space<smem>>
    memref.store %118, %arg3[%c0_29, %c2] : memref<1x5xf32, #tpu.memory_space<smem>>
    %c0_30 = arith.constant 0 : index
    %c0_31 = arith.constant 0 : index
    %120 = vector.load %arg2[%c0_30, %c0_31] : memref<8x128xf32, #tpu.memory_space<vmem>>, vector<8x128xf32>
    %121 = vector.extract_strided_slice %120 {offsets = [0, 0], sizes = [4, 128], strides = [1, 1]} : vector<8x128xf32> to vector<4x128xf32>
    %122 = vector.extract_strided_slice %120 {offsets = [4, 0], sizes = [4, 128], strides = [1, 1]} : vector<8x128xf32> to vector<4x128xf32>
    %123 = arith.subf %121, %122 : vector<4x128xf32>
    %124 = math.absf %123 : vector<4x128xf32>
    %125 = vector.shape_cast %124 : vector<4x128xf32> to vector<1x4x128xf32>
    %cst_32 = arith.constant dense<0.000000e+00> : vector<1xf32>
    %126 = vector.multi_reduction <add>, %125, %cst_32 [1, 2] : vector<1x4x128xf32> to vector<1xf32>
    %127 = vector.shape_cast %126 : vector<1xf32> to vector<1x1x1xf32>
    %128 = vector.extract %127[0, 0, 0] : f32 from vector<1x1x1xf32>
    %cst_33 = arith.constant 6.000000e+00 : f32
    %129 = arith.divf %128, %cst_33 : f32
    %c0_34 = arith.constant 0 : index
    %c3 = arith.constant 3 : index
    %130 = memref.load %arg3[%c0_34, %c3] : memref<1x5xf32, #tpu.memory_space<smem>>
    memref.store %129, %arg3[%c0_34, %c3] : memref<1x5xf32, #tpu.memory_space<smem>>
    %131 = vector.extract_strided_slice %121 {offsets = [0, 0], sizes = [1, 128], strides = [1, 1]} : vector<4x128xf32> to vector<1x128xf32>
    %132 = vector.extract_strided_slice %121 {offsets = [1, 0], sizes = [1, 128], strides = [1, 1]} : vector<4x128xf32> to vector<1x128xf32>
    %133 = vector.extract_strided_slice %121 {offsets = [2, 0], sizes = [1, 128], strides = [1, 1]} : vector<4x128xf32> to vector<1x128xf32>
    %134 = vector.extract_strided_slice %121 {offsets = [3, 0], sizes = [1, 128], strides = [1, 1]} : vector<4x128xf32> to vector<1x128xf32>
    %cst_35 = arith.constant 5.000000e-01 : f32
    %135 = vector.broadcast %cst_35 : f32 to vector<1x128xf32>
    %136 = arith.mulf %135, %133 : vector<1x128xf32>
    %137 = arith.subf %131, %136 : vector<1x128xf32>
    %cst_36 = arith.constant 5.000000e-01 : f32
    %138 = vector.broadcast %cst_36 : f32 to vector<1x128xf32>
    %139 = arith.mulf %138, %134 : vector<1x128xf32>
    %140 = arith.subf %132, %139 : vector<1x128xf32>
    %cst_37 = arith.constant 5.000000e-01 : f32
    %141 = vector.broadcast %cst_37 : f32 to vector<1x128xf32>
    %142 = arith.mulf %141, %133 : vector<1x128xf32>
    %143 = arith.addf %131, %142 : vector<1x128xf32>
    %cst_38 = arith.constant 5.000000e-01 : f32
    %144 = vector.broadcast %cst_38 : f32 to vector<1x128xf32>
    %145 = arith.mulf %144, %134 : vector<1x128xf32>
    %146 = arith.addf %132, %145 : vector<1x128xf32>
    %147 = vector.extract_strided_slice %122 {offsets = [0, 0], sizes = [1, 128], strides = [1, 1]} : vector<4x128xf32> to vector<1x128xf32>
    %148 = vector.extract_strided_slice %122 {offsets = [1, 0], sizes = [1, 128], strides = [1, 1]} : vector<4x128xf32> to vector<1x128xf32>
    %149 = vector.extract_strided_slice %122 {offsets = [2, 0], sizes = [1, 128], strides = [1, 1]} : vector<4x128xf32> to vector<1x128xf32>
    %150 = vector.extract_strided_slice %122 {offsets = [3, 0], sizes = [1, 128], strides = [1, 1]} : vector<4x128xf32> to vector<1x128xf32>
    %cst_39 = arith.constant 5.000000e-01 : f32
    %151 = vector.broadcast %cst_39 : f32 to vector<1x128xf32>
    %152 = arith.mulf %151, %149 : vector<1x128xf32>
    %153 = arith.subf %147, %152 : vector<1x128xf32>
    %cst_40 = arith.constant 5.000000e-01 : f32
    %154 = vector.broadcast %cst_40 : f32 to vector<1x128xf32>
    %155 = arith.mulf %154, %150 : vector<1x128xf32>
    %156 = arith.subf %148, %155 : vector<1x128xf32>
    %cst_41 = arith.constant 5.000000e-01 : f32
    %157 = vector.broadcast %cst_41 : f32 to vector<1x128xf32>
    %158 = arith.mulf %157, %149 : vector<1x128xf32>
    %159 = arith.addf %147, %158 : vector<1x128xf32>
    %cst_42 = arith.constant 5.000000e-01 : f32
    %160 = vector.broadcast %cst_42 : f32 to vector<1x128xf32>
    %161 = arith.mulf %160, %150 : vector<1x128xf32>
    %162 = arith.addf %148, %161 : vector<1x128xf32>
    %163 = arith.subf %143, %137 : vector<1x128xf32>
    %164 = arith.subf %146, %140 : vector<1x128xf32>
    %165 = arith.mulf %163, %164 : vector<1x128xf32>
    %166 = arith.subf %159, %153 : vector<1x128xf32>
    %167 = arith.subf %162, %156 : vector<1x128xf32>
    %168 = arith.mulf %166, %167 : vector<1x128xf32>
    %169 = arith.minimumf %143, %159 : vector<1x128xf32>
    %170 = arith.maximumf %137, %153 : vector<1x128xf32>
    %171 = arith.subf %169, %170 : vector<1x128xf32>
    %cst_43 = arith.constant 0.000000e+00 : f32
    %172 = vector.broadcast %cst_43 : f32 to vector<1x128xf32>
    %173 = arith.maximumf %171, %172 : vector<1x128xf32>
    %174 = arith.minimumf %146, %162 : vector<1x128xf32>
    %175 = arith.maximumf %140, %156 : vector<1x128xf32>
    %176 = arith.subf %174, %175 : vector<1x128xf32>
    %cst_44 = arith.constant 0.000000e+00 : f32
    %177 = vector.broadcast %cst_44 : f32 to vector<1x128xf32>
    %178 = arith.maximumf %176, %177 : vector<1x128xf32>
    %179 = arith.mulf %173, %178 : vector<1x128xf32>
    %180 = arith.addf %165, %168 : vector<1x128xf32>
    %181 = arith.subf %180, %179 : vector<1x128xf32>
    %cst_45 = arith.constant 9.99999971E-10 : f32
    %182 = vector.broadcast %cst_45 : f32 to vector<1x128xf32>
    %183 = arith.maximumf %181, %182 : vector<1x128xf32>
    %184 = arith.divf %179, %183 : vector<1x128xf32>
    %185 = arith.maximumf %143, %159 : vector<1x128xf32>
    %186 = arith.minimumf %137, %153 : vector<1x128xf32>
    %187 = arith.subf %185, %186 : vector<1x128xf32>
    %cst_46 = arith.constant 0.000000e+00 : f32
    %188 = vector.broadcast %cst_46 : f32 to vector<1x128xf32>
    %189 = arith.maximumf %187, %188 : vector<1x128xf32>
    %190 = arith.maximumf %146, %162 : vector<1x128xf32>
    %191 = arith.minimumf %140, %156 : vector<1x128xf32>
    %192 = arith.subf %190, %191 : vector<1x128xf32>
    %cst_47 = arith.constant 0.000000e+00 : f32
    %193 = vector.broadcast %cst_47 : f32 to vector<1x128xf32>
    %194 = arith.maximumf %192, %193 : vector<1x128xf32>
    %195 = arith.mulf %189, %194 : vector<1x128xf32>
    %196 = arith.subf %195, %181 : vector<1x128xf32>
    %cst_48 = arith.constant 9.99999971E-10 : f32
    %197 = vector.broadcast %cst_48 : f32 to vector<1x128xf32>
    %198 = arith.maximumf %195, %197 : vector<1x128xf32>
    %199 = arith.divf %196, %198 : vector<1x128xf32>
    %200 = arith.subf %184, %199 : vector<1x128xf32>
    %cst_49 = arith.constant 1.000000e+00 : f32
    %201 = vector.broadcast %cst_49 : f32 to vector<1x128xf32>
    %202 = arith.subf %201, %200 : vector<1x128xf32>
    %203 = vector.shape_cast %202 : vector<1x128xf32> to vector<1x1x128xf32>
    %cst_50 = arith.constant dense<0.000000e+00> : vector<1xf32>
    %204 = vector.multi_reduction <add>, %203, %cst_50 [1, 2] : vector<1x1x128xf32> to vector<1xf32>
    %205 = vector.shape_cast %204 : vector<1xf32> to vector<1x1x1xf32>
    %206 = vector.extract %205[0, 0, 0] : f32 from vector<1x1x1xf32>
    %cst_51 = arith.constant 6.000000e+00 : f32
    %207 = arith.divf %206, %cst_51 : f32
    %c0_52 = arith.constant 0 : index
    %c4 = arith.constant 4 : index
    %208 = memref.load %arg3[%c0_52, %c4] : memref<1x5xf32, #tpu.memory_space<smem>>
    memref.store %207, %arg3[%c0_52, %c4] : memref<1x5xf32, #tpu.memory_space<smem>>
    return
  }
}

</mosaic_0001>

<llo_original>
// kernel: tpu_custom_call.1
$region0: #{tpu_custom_call.1}
  #allocation0 [shape = 'u32[]', space=smem, size = 0x4, offset = 0x4, fixed_abs, tag = 'smem constant byte address 0x4 - core index']
  #allocation1 [shape = 'u32[144,128]{1,0:T(1,128)}', space=vmem, size = 0x12000, scoped, tag = 'internal scratch']
  %s0 = inlined_call_operand.hbm [shape: f32[5,8,128], index: 0, kind: input, shape index: {}]
  %s1 = inlined_call_operand.hbm [shape: s32[8,128], index: 1, kind: input, shape index: {}]
  %s2 = inlined_call_operand.hbm [shape: f32[8,128], index: 2, kind: input, shape index: {}]
  %s3 = inlined_call_operand.hbm [shape: f32[1,5], index: 3, kind: output, shape index: {}]
  %s4 = sld [smem:[#allocation0]]
  $region34: #{tpu_custom_call.1} parent=0
    _
  %s6 = ssub.s32 1, %s4
  %s7 = scalar_select 0, %s6, %s4
  $region1: #{tpu_custom_call.1} parent=0
    #allocation2 [shape = 'u8[20480]{0}', space=vmem, size = 0x5000, scoped, tag = 'input window, operand 0, single buffered']
    #allocation3 [shape = 's32[1]{0}', space=sflag, size = 0x4, scoped, tag = 'scoped memory for tpu_custom_call.1']
    #allocation4 [shape = 's32[1]{0}', space=sflag, size = 0x4, scoped, tag = 'scoped memory for tpu_custom_call.1']
    #allocation5 [shape = 'u8[4096]{0}', space=vmem, size = 0x1000, scoped, tag = 'input window, operand 1, single buffered']
    #allocation6 [shape = 's32[1]{0}', space=sflag, size = 0x4, scoped, tag = 'scoped memory for tpu_custom_call.1']
    #allocation7 [shape = 'u8[4096]{0}', space=vmem, size = 0x1000, scoped, tag = 'input window, operand 2, single buffered']
    #allocation8 [shape = 'u8[512]{0}', space=smem, size = 0x200, scoped, tag = 'output window, operand 0, single buffered']
    %8 = vsyncpa [#allocation3], 0
    %9 = vsyncpa [#allocation6], 0
    %10 = vsyncpa [#allocation4], 0
    // Predicated region
    $region2: #{tpu_custom_call.1} parent=1 // pred_check
      _
    $region3: #{tpu_custom_call.1} parent=1 // pred_check_branch
      %12 = sbr.rel (0) target = $region5
    $region4: #{tpu_custom_call.1} parent=1 // pred_region
      %s14 = ssub.s32 640, 640
      %15 = vsyncadd [#allocation3], %s14
      %s16 = sshll.u32 [#allocation2], 4
      %s17 = int_to_ptr.vmem [resolvable:$true] %s16
      %22 = dma.hbm_to_vmem [thread:$0]  %s0, 640, %s17, [#allocation3], 128, 128, 8
    $region5: #{tpu_custom_call.1} parent=1 // pred_fallthru
      _
    // Predicated region
    $region6: #{tpu_custom_call.1} parent=1 // pred_check
      _
    $region7: #{tpu_custom_call.1} parent=1 // pred_check_branch
      %24 = sbr.rel (0) target = $region9
    $region8: #{tpu_custom_call.1} parent=1 // pred_region
      %s26 = ssub.s32 128, 128
      %27 = vsyncadd [#allocation6], %s26
      %s29 = sshll.u32 [#allocation5], 4
      %s30 = int_to_ptr.vmem [resolvable:$true] %s29
      %32 = dma.hbm_to_vmem [thread:$0]  %s1, 128, %s30, [#allocation6]
    $region9: #{tpu_custom_call.1} parent=1 // pred_fallthru
      _
    // Predicated region
    $region10: #{tpu_custom_call.1} parent=1 // pred_check
      _
    $region11: #{tpu_custom_call.1} parent=1 // pred_check_branch
      %34 = sbr.rel (0) target = $region13
    $region12: #{tpu_custom_call.1} parent=1 // pred_region
      %s36 = ssub.s32 128, 128
      %37 = vsyncadd [#allocation6], %s36
      %s39 = sshll.u32 [#allocation7], 4
      %s40 = int_to_ptr.vmem [resolvable:$true] %s39
      %42 = dma.hbm_to_vmem [thread:$0]  %s2, 128, %s40, [#allocation6]
    $region13: #{tpu_custom_call.1} parent=1 // pred_fallthru
      _
    // Predicated region
    $region14: #{tpu_custom_call.1} parent=1 // pred_check
      _
    $region15: #{tpu_custom_call.1} parent=1 // pred_check_branch
      %44 = sbr.rel (0) target = $region17
    $region16: #{tpu_custom_call.1} parent=1 // pred_region
      %45 = dma.done [#allocation3], 640
    $region17: #{tpu_custom_call.1} parent=1 // pred_fallthru
      _
    // Predicated region
    $region18: #{tpu_custom_call.1} parent=1 // pred_check
      _
    $region19: #{tpu_custom_call.1} parent=1 // pred_check_branch
      %47 = sbr.rel (0) target = $region21
    $region20: #{tpu_custom_call.1} parent=1 // pred_region
      %48 = dma.done [#allocation6], 128
    $region21: #{tpu_custom_call.1} parent=1 // pred_fallthru
      _
    // Predicated region
    $region22: #{tpu_custom_call.1} parent=1 // pred_check
      _
    $region23: #{tpu_custom_call.1} parent=1 // pred_check_branch
      %50 = sbr.rel (0) target = $region25
    $region24: #{tpu_custom_call.1} parent=1 // pred_region
      %51 = dma.done [#allocation6], 128
    $region25: #{tpu_custom_call.1} parent=1 // pred_fallthru
      _
    %v52 = vld [vmem:[#allocation2] sm:$0xff]
    %v53 = vld [vmem:[#allocation2 + $0x8] sm:$0xff]
    %v54 = vld [vmem:[#allocation2 + $0x10] sm:$0xff]
    %v55 = vld [vmem:[#allocation2 + $0x18] sm:$0xff]
    %v56 = vld [vmem:[#allocation2 + $0x20] sm:$0xff]
    %v57 = vld [vmem:[#allocation5] sm:$0xff]
    %vm58 = vcmp.ge.s32.totalorder %v57, 0
    %vm59 = vcmp.lt.s32.totalorder %v57, 4
    %vm60 = vmand %vm58, %vm59
    %v61 = vmax.f32 %v52, %v53
    %v62 = vmax.f32 %v61, %v54
    %v63 = vmax.f32 %v62, %v55
    %v64 = vmax.f32 %v63, %v56
    %v65 = vsub.f32 %v52, %v64
    %v66 = vmul.f32 %v65, 1.442695
    %v67 = vpow.pop %v66
    %v68 = vadd.f32 %v67, 0.0
    %vm69 = vcmp.eq.s32.totalorder %v57, 0
    %v70 = vsel %vm69, %v52, 0.0
    %v71 = vsub.f32 %v53, %v64
    %v72 = vmul.f32 %v71, 1.442695
    %v73 = vpow.pop %v72
    %v74 = vadd.f32 %v68, %v73
    %vm75 = vcmp.eq.s32.totalorder %v57, 1
    %v76 = vsel %vm75, %v53, %v70
    %v77 = vsub.f32 %v54, %v64
    %v78 = vmul.f32 %v77, 1.442695
    %v79 = vpow.pop %v78
    %v80 = vadd.f32 %v74, %v79
    %vm81 = vcmp.eq.s32.totalorder %v57, 2
    %v82 = vsel %vm81, %v54, %v76
    %v83 = vsub.f32 %v55, %v64
    %v84 = vmul.f32 %v83, 1.442695
    %v85 = vpow.pop %v84
    %v86 = vadd.f32 %v80, %v85
    %vm87 = vcmp.eq.s32.totalorder %v57, 3
    %v88 = vsel %vm87, %v55, %v82
    %v89 = vsub.f32 %v56, %v64
    %v90 = vmul.f32 %v89, 1.442695
    %v91 = vpow.pop %v90
    %v92 = vadd.f32 %v86, %v91
    %vm93 = vcmp.eq.s32.totalorder %v57, 4
    %v94 = vsel %vm93, %v56, %v88
    %v95 = vlog2.pop %v92
    %v96 = vmul.f32 %v95, 0.6931472
    %v97 = vadd.f32 %v96, %v64
    %v98 = vsel %vm93, 0.1, 1.0
    %v99 = vsel %vm58, %v98, 0.0
    %v100 = vsub.f32 %v97, %v94
    %v101 = vmul.f32 %v99, %v100
    %102 = vadd.xlane.f32.xlu0 %v101
    %v103 = vpop.xlane.xlu0 %102
    %v104 = vrot.slane %v103, 4
    %v105 = vadd.f32 %v103, %v104
    %v106 = vrot.slane %v105, 2
    %v107 = vadd.f32 %v105, %v106
    %v108 = vrot.slane %v107, 1
    %v109 = vadd.f32 %v107, %v108
    %s110 = vtos %v109
    %111 = vadd.xlane.f32.xlu0 %v99
    %v112 = vpop.xlane.xlu0 %111
    %v113 = vrot.slane %v112, 4
    %v114 = vadd.f32 %v112, %v113
    %v115 = vrot.slane %v114, 2
    %v116 = vadd.f32 %v114, %v115
    %v117 = vrot.slane %v116, 1
    %v118 = vadd.f32 %v116, %v117
    %s119 = vtos %v118
    %v120 = vstv %s119
    %v121 = vrcp.pop %v120
    %s122 = vtos %v121
    %s123 = smul.f32 %s110, %s122
    %s124 = scalar_lea.smem [#allocation8], 0
    %125 = sst [smem:[%s124]] %s123
    %vm126 = vcmp.eq.f32.partialorder %v94, %v64
    %vm127 = vmand %vm60, %vm126
    %v128 = vsel %vm127, 1.0, 0.0
    %129 = vadd.xlane.f32.xlu0 %v128
    %v130 = vpop.xlane.xlu0 %129
    %v131 = vrot.slane %v130, 4
    %v132 = vadd.f32 %v130, %v131
    %v133 = vrot.slane %v132, 2
    %v134 = vadd.f32 %v132, %v133
    %v135 = vrot.slane %v134, 1
    %v136 = vadd.f32 %v134, %v135
    %s137 = vtos %v136
    %s138 = smul.f32 %s137, 100.0
    %v139 = vrcp.pop 6.0
    %s140 = vtos %v139
    %s141 = smul.f32 %s138, %s140
    %s142 = ssub.f32 100.0, %s141
    %s143 = scalar_lea.smem [#allocation8], 1
    %144 = sst [smem:[%s143]] %s142
    %vm145 = vcmp.ge.f32.partialorder %v63, %v56
    %v146 = vsel %vm145, 1, 0
    %v147 = vcvt.s32.f32 %v146
    %v148 = vsel %vm58, %v147, 0.0
    %149 = vadd.xlane.f32.xlu0 %v148
    %v150 = vpop.xlane.xlu0 %149
    %v151 = vlaneseq
    %v152 = vshrl.u32 %v151, 7
    %vm153 = vcmp.lt.s32.totalorder %v152, 2
    %v154 = vsub.f32 %v150, 3.0
    %v155 = vand.u32 2147483647, %v154
    %v156 = vsel %vm153, %v155, 0.0
    %vm157 = vcmask 7168
    %v158 = vsel %vm157, %v156, 0.0
    %159 = vadd.xlane.f32.xlu0 %v158
    %v160 = vpop.xlane.xlu0 %159
    %v161 = vrot.slane %v160, 4
    %v162 = vadd.f32 %v160, %v161
    %v163 = vrot.slane %v162, 2
    %v164 = vadd.f32 %v162, %v163
    %v165 = vrot.slane %v164, 1
    %v166 = vadd.f32 %v164, %v165
    %s167 = vtos %v166
    %v168 = vrcp.pop 2.0
    %s169 = vtos %v168
    %s170 = smul.f32 %s167, %s169
    %s171 = scalar_lea.smem [#allocation8], 2
    %172 = sst [smem:[%s171]] %s170
    %v173 = vld [vmem:[#allocation7] sm:$0xff]
    %v175 = vrot.slane %v173, 4
    %v177 = vsub.f32 %v173, %v175
    %v178 = vand.u32 2147483647, %v177
    %vm179 = vcmask 1043456
    %v180 = vsel %vm179, %v178, 0.0
    %181 = vadd.xlane.f32.xlu0 %v180
    %v182 = vpop.xlane.xlu0 %181
    %v183 = vrot.slane %v182, 4
    %v184 = vadd.f32 %v182, %v183
    %v185 = vrot.slane %v184, 2
    %v186 = vadd.f32 %v184, %v185
    %v187 = vrot.slane %v186, 1
    %v188 = vadd.f32 %v186, %v187
    %s189 = vtos %v188
    %v190 = vrcp.pop 6.0
    %s191 = vtos %v190
    %s192 = smul.f32 %s189, %s191
    %s193 = scalar_lea.smem [#allocation8], 3
    %194 = sst [smem:[%s193]] %s192
    %v195 = vmul.f32 %v173, 0.5
    %v197 = vrot.slane %v195, 2
    %v199 = vsub.f32 %v173, %v197
    %v200 = vadd.f32 %v173, %v197
    %v201 = vsub.f32 %v200, %v199
    %v203 = vrot.slane %v201, 1
    %v205 = vmul.f32 %v201, %v203
    %v207 = vrot.slane %v200, 4
    %v209 = vmin.f32 %v200, %v207
    %v211 = vrot.slane %v199, 4
    %v213 = vmax.f32 %v199, %v211
    %v214 = vsub.f32 %v209, %v213
    %v215 = vmax.f32 %v214, 0.0
    %v217 = vrot.slane %v215, 1
    %v219 = vmul.f32 %v215, %v217
    %v221 = vrot.slane %v205, 4
    %v223 = vadd.f32 %v205, %v221
    %v224 = vsub.f32 %v223, %v219
    %v225 = vmax.f32 %v224, 1e-09
    %v226 = vrcp.pop %v225
    %v227 = vmul.f32 %v219, %v226
    %v228 = vmax.f32 %v200, %v207
    %v229 = vmin.f32 %v199, %v211
    %v230 = vsub.f32 %v228, %v229
    %v231 = vmax.f32 %v230, 0.0
    %v233 = vrot.slane %v231, 1
    %v235 = vmul.f32 %v231, %v233
    %v236 = vsub.f32 %v235, %v224
    %v237 = vmax.f32 %v235, 1e-09
    %v238 = vrcp.pop %v237
    %v239 = vmul.f32 %v236, %v238
    %v240 = vsub.f32 %v227, %v239
    %v241 = vsub.f32 1.0, %v240
    %vm242 = vcmask 1040384
    %v243 = vsel %vm242, %v241, 0.0
    %244 = vadd.xlane.f32.xlu0 %v243
    %v245 = vpop.xlane.xlu0 %244
    %v246 = vrot.slane %v245, 4
    %v247 = vadd.f32 %v245, %v246
    %v248 = vrot.slane %v247, 2
    %v249 = vadd.f32 %v247, %v248
    %v250 = vrot.slane %v249, 1
    %v251 = vadd.f32 %v249, %v250
    %s252 = vtos %v251
    %v253 = vrcp.pop 6.0
    %s254 = vtos %v253
    %s255 = smul.f32 %s252, %s254
    %s256 = scalar_lea.smem [#allocation8], 4
    %257 = sst [smem:[%s256]] %s255
    // Predicated region
    $region26: #{tpu_custom_call.1} parent=1 // pred_check
      _
    $region27: #{tpu_custom_call.1} parent=1 // pred_check_branch
      %259 = sbr.rel (0) target = $region29
    $region28: #{tpu_custom_call.1} parent=1 // pred_region
      %s261 = ssub.s32 16, 16
      %262 = vsyncadd [#allocation4], %s261
      %265 = dma.smem_to_hbm [#allocation8], 16, %s3, [#allocation4]
    $region29: #{tpu_custom_call.1} parent=1 // pred_fallthru
      _
    // Predicated region
    $region30: #{tpu_custom_call.1} parent=1 // pred_check
      _
    $region31: #{tpu_custom_call.1} parent=1 // pred_check_branch
      %267 = sbr.rel (0) target = $region33
    $region32: #{tpu_custom_call.1} parent=1 // pred_region
      %268 = dma.done [#allocation4], 16
    $region33: #{tpu_custom_call.1} parent=1 // pred_fallthru
      _
    %269 = sfence
    %270 = vsyncpa [#allocation3], 1
    %271 = vsyncpa [#allocation6], 1
    %272 = vsyncpa [#allocation4], 1

</llo_original>
